<compile_context>
chip_gen: v5e
topology: v5e:2x2
jax: 0.10.0
libtpu: 0.0.40
codegen_flags: <defaults>
</compile_context>

<pallas_src>
import functools

import jax
import jax.numpy as jnp
import numpy as np
from jax.experimental import pallas as pl
from jax.experimental.pallas import tpu as pltpu


def _drop_path_kernel(scale_ref, x_ref, o_ref):
    """scale_ref: (TB, 1) per-row scale; x_ref/o_ref: (TB, TF) tiles."""
    o_ref[...] = x_ref[...] * scale_ref[...]   # broadcast over the lane axis


def _pick_tiles(B, F, itemsize, target_bytes=4 * 1024 * 1024):
    """Choose (TB, TF) so one x tile is ~target_bytes and layout-legal."""
    # Feature-axis tile: whole F if 8 rows of it fit the budget, else a
    # lane-dense multiple of 128.
    if F * itemsize * 8 <= target_bytes:
        tf = F
    else:
        tf = max(128, ((target_bytes // (8 * itemsize)) // 128) * 128)
    # Batch-axis tile: pack rows up to the budget; sublane-align (x8) unless
    # it covers the whole batch (full-dim blocks are always legal).
    tb = max(1, target_bytes // (tf * itemsize))
    if tb >= B:
        tb = B
    else:
        tb = max(8, (tb // 8) * 8)
    return tb, tf


def drop_path(x, drop_prob=0.0, *, key=None, seed=0, training=True):
    """Pallas DropPath.  x: (B, ...) with the mask broadcast over non-batch axes."""
    if (not training) or drop_prob == 0.0:
        return x
    keep_prob = 1.0 - drop_prob

    B = x.shape[0]
    F = int(np.prod(x.shape[1:])) if x.ndim > 1 else 1
    x2 = x.reshape(B, F)

    # Host-side per-sample mask: floor(keep_prob + U[0,1)) in {0, 1},
    # folded with 1/keep_prob and cast to the native dtype.
    if key is None:
        key = jax.random.PRNGKey(seed)
    u = jax.random.uniform(key, (B,), dtype=jnp.float32)
    mask = jnp.floor(jnp.float32(keep_prob) + u)
    scale = (mask * jnp.float32(1.0 / keep_prob)).astype(x.dtype).reshape(B, 1)

    itemsize = jnp.dtype(x.dtype).itemsize
    tb, tf = _pick_tiles(B, F, itemsize)
    grid = (pl.cdiv(B, tb), pl.cdiv(F, tf))

    out2 = pl.pallas_call(
        _drop_path_kernel,
        out_shape=jax.ShapeDtypeStruct((B, F), x.dtype),
        grid_spec=pl.GridSpec(
            grid=grid,
            in_specs=[
                pl.BlockSpec((tb, 1), lambda i, j: (i, 0)),   # per-row scale
                pl.BlockSpec((tb, tf), lambda i, j: (i, j)),  # x tile
            ],
            out_specs=pl.BlockSpec((tb, tf), lambda i, j: (i, j)),
        ),
        compiler_params=pltpu.CompilerParams(
            dimension_semantics=("parallel", "parallel"),
            vmem_limit_bytes=32 * 1024 * 1024,
        ),
    )(scale, x2)
    return out2.reshape(x.shape)


if __name__ == "__main__":
    key = jax.random.PRNGKey(0)
    B, N, D = 4, 8, 128
    x = jax.random.normal(key, (B, N, D), dtype=jnp.float32)
    drop_prob = 0.3
    keep_prob = 1.0 - drop_prob

    # Training path (stochastic depth active).
    y = drop_path(x, drop_prob=drop_prob, seed=123, training=True)
    y = jax.block_until_ready(y)

    # Sanity check: every sample is either dropped (all zeros) or scaled by
    # 1/keep_prob -- exactly the PyTorch DropPath semantics.
    xh, yh = np.asarray(x), np.asarray(y)
    for b in range(B):
        kept = np.allclose(yh[b], xh[b] / keep_prob, rtol=1e-5, atol=1e-5)
        dropped = np.allclose(yh[b], 0.0, atol=1e-6)
        assert kept or dropped, f"sample {b} is neither kept nor dropped"

    # Eval / drop_prob == 0 path is identity (no kernel launch).
    y_eval = jax.block_until_ready(drop_path(x, drop_prob=drop_prob, training=False))
    assert np.allclose(np.asarray(y_eval), xh)
    y_p0 = jax.block_until_ready(drop_path(x, drop_prob=0.0, training=True))
    assert np.allclose(np.asarray(y_p0), xh)

    print("KERNEL_OK")
</pallas_src>

<mosaic_0001>
module attributes {stable_mosaic.version = 11 : i64} {
  func.func @_drop_path_kernel(%arg0: i32, %arg1: i32, %arg2: memref<4x1xf32, #tpu.memory_space<vmem>>, %arg3: memref<4x1024xf32, #tpu.memory_space<vmem>>, %arg4: memref<4x1024xf32, #tpu.memory_space<vmem>>) attributes {dimension_semantics = [#tpu.dimension_semantics<parallel>, #tpu.dimension_semantics<parallel>], iteration_bounds = array<i64: 1, 1>, scalar_prefetch = 0 : i64, scratch_operands = 0 : i64, tpu.core_type = #tpu.core_type<tc>, window_params = [{transform_indices = @transform_0, window_bounds = array<i64: 4, 1>}, {transform_indices = @transform_1, window_bounds = array<i64: 4, 1024>}, {transform_indices = @transform_2, window_bounds = array<i64: 4, 1024>}]} {
    %c0 = arith.constant 0 : index
    %c0_0 = arith.constant 0 : index
    %0 = vector.load %arg3[%c0, %c0_0] : memref<4x1024xf32, #tpu.memory_space<vmem>>, vector<4x1024xf32>
    %c0_1 = arith.constant 0 : index
    %c0_2 = arith.constant 0 : index
    %1 = vector.load %arg2[%c0_1, %c0_2] : memref<4x1xf32, #tpu.memory_space<vmem>>, vector<4x1xf32>
    %2 = vector.broadcast %1 : vector<4x1xf32> to vector<4x1024xf32>
    %3 = arith.mulf %0, %2 : vector<4x1024xf32>
    %c0_3 = arith.constant 0 : index
    %c0_4 = arith.constant 0 : index
    %4 = vector.load %arg4[%c0_3, %c0_4] : memref<4x1024xf32, #tpu.memory_space<vmem>>, vector<4x1024xf32>
    tpu.vector_store %arg4[%c0_3, %c0_4], %3 {strides = array<i32>} : memref<4x1024xf32, #tpu.memory_space<vmem>>, vector<4x1024xf32>,
    return
  }
  func.func @transform_0(%arg0: i32, %arg1: i32) -> (i32, i32) {
    %c0_i32 = arith.constant 0 : i32
    %c0_i32_0 = arith.constant 0 : i32
    return %arg0, %c0_i32 : i32, i32
  }
  func.func @transform_1(%arg0: i32, %arg1: i32) -> (i32, i32) {
    %c0_i32 = arith.constant 0 : i32
    return %arg0, %arg1 : i32, i32
  }
  func.func @transform_2(%arg0: i32, %arg1: i32) -> (i32, i32) {
    %c0_i32 = arith.constant 0 : i32
    return %arg0, %arg1 : i32, i32
  }
}

</mosaic_0001>

<llo_original>
// kernel: tpu_custom_call.1
$region0: #{tpu_custom_call.1}
  #allocation0 [shape = 'u32[]', space=smem, size = 0x4, offset = 0x4, fixed_abs, tag = 'smem constant byte address 0x4 - core index']
  #allocation1 [shape = 'u32[72,128]{1,0:T(1,128)}', space=vmem, size = 0x9000, scoped, tag = 'internal scratch']
  %s0 = inlined_call_operand.vmem [shape: f32[4,1], index: 0, kind: input, shape index: {}]
  %s1 = inlined_call_operand.hbm [shape: f32[4,1024], index: 1, kind: input, shape index: {}]
  %s2 = inlined_call_operand.hbm [shape: f32[4,1024], index: 2, kind: output, shape index: {}]
  %s3 = sld [smem:[#allocation0]]
  $region22: #{tpu_custom_call.1} parent=0
    _
  %s5 = ssub.s32 1, %s3
  %s6 = scalar_select 0, %s5, %s3
  $region1: #{tpu_custom_call.1} parent=0
    #allocation2 [shape = 'u8[16384]{0}', space=vmem, size = 0x4000, scoped, tag = 'input window, operand 1, single buffered']
    #allocation3 [shape = 's32[1]{0}', space=sflag, size = 0x4, scoped, tag = 'scoped memory for tpu_custom_call.1']
    #allocation4 [shape = 's32[1]{0}', space=sflag, size = 0x4, scoped, tag = 'scoped memory for tpu_custom_call.1']
    #allocation5 [shape = 'u8[16384]{0}', space=vmem, size = 0x4000, scoped, tag = 'output window, operand 0, single buffered']
    %7 = vsyncpa [#allocation3], 0
    %8 = vsyncpa [#allocation4], 0
    // Predicated region
    $region2: #{tpu_custom_call.1} parent=1 // pred_check
      _
    $region3: #{tpu_custom_call.1} parent=1 // pred_check_branch
      %10 = sbr.rel (0) target = $region5
    $region4: #{tpu_custom_call.1} parent=1 // pred_region
      _
    $region5: #{tpu_custom_call.1} parent=1 // pred_fallthru
      _
    // Predicated region
    $region6: #{tpu_custom_call.1} parent=1 // pred_check
      _
    $region7: #{tpu_custom_call.1} parent=1 // pred_check_branch
      %12 = sbr.rel (0) target = $region9
    $region8: #{tpu_custom_call.1} parent=1 // pred_region
      %14 = vsyncadd [#allocation3], 0
      %s16 = sshll.u32 %s1, 4
      %s17 = int_to_ptr.hbm [resolvable:$true] %s16
      %s18 = sshll.u32 [#allocation2], 4
      %s19 = int_to_ptr.vmem [resolvable:$true] %s18
      %21 = dma.hbm_to_vmem [thread:$0]  %s17, 512, %s19, [#allocation3]
    $region9: #{tpu_custom_call.1} parent=1 // pred_fallthru
      _
    // Predicated region
    $region10: #{tpu_custom_call.1} parent=1 // pred_check
      _
    $region11: #{tpu_custom_call.1} parent=1 // pred_check_branch
      %23 = sbr.rel (0) target = $region13
    $region12: #{tpu_custom_call.1} parent=1 // pred_region
      %25 = dma.done [#allocation3], 512
    $region13: #{tpu_custom_call.1} parent=1 // pred_fallthru
      _
    %v26 = vld [vmem:[#allocation2] sm:$0xff]
    %v27 = vld [vmem:[#allocation2 + $0x8] sm:$0xff]
    %v28 = vld [vmem:[#allocation2 + $0x10] sm:$0xff]
    %v29 = vld [vmem:[#allocation2 + $0x18] sm:$0xff]
    %v30 = vld [vmem:[%s0] sm:$0xf]
    %32 = vset.pattern.permute.xlu0 0
    %33 = vperm.xlu0 %32, %v30
    %v34 = vpop.permute.xlu0 %33
    %v36 = vunpack.c.l.s4 839922192
    %v37 = vunpack.c.0.s8 %v36
    %v38 = vperm.slane %v34, %v37
    %v40 = vmul.f32 %v26, %v38
    %v41 = vmul.f32 %v27, %v38
    %v42 = vmul.f32 %v28, %v38
    %v43 = vmul.f32 %v29, %v38
    %44 = vst [vmem:[#allocation5] sm:$0xff] %v40
    %45 = vst [vmem:[#allocation5 + $0x8] sm:$0xff] %v41
    %46 = vst [vmem:[#allocation5 + $0x10] sm:$0xff] %v42
    %47 = vst [vmem:[#allocation5 + $0x18] sm:$0xff] %v43
    // Predicated region
    $region14: #{tpu_custom_call.1} parent=1 // pred_check
      _
    $region15: #{tpu_custom_call.1} parent=1 // pred_check_branch
      %49 = sbr.rel (0) target = $region17
    $region16: #{tpu_custom_call.1} parent=1 // pred_region
      %51 = vsyncadd [#allocation4], 0
      %s53 = sshll.u32 [#allocation5], 4
      %s54 = int_to_ptr.vmem [resolvable:$true] %s53
      %s55 = sshll.u32 %s2, 4
      %s56 = int_to_ptr.hbm [resolvable:$true] %s55
      %58 = dma.vmem_to_hbm [thread:$0]  %s54, 512, %s56, [#allocation4]
    $region17: #{tpu_custom_call.1} parent=1 // pred_fallthru
      _
    // Predicated region
    $region18: #{tpu_custom_call.1} parent=1 // pred_check
      _
    $region19: #{tpu_custom_call.1} parent=1 // pred_check_branch
      %60 = sbr.rel (0) target = $region21
    $region20: #{tpu_custom_call.1} parent=1 // pred_region
      %62 = dma.done [#allocation4], 512
    $region21: #{tpu_custom_call.1} parent=1 // pred_fallthru
      _
    %63 = vsyncpa [#allocation3], 1
    %64 = vsyncpa [#allocation4], 1

</llo_original>
